<compile_context>
chip_gen: v6e
topology: v6e:2x2x1
jax: 0.10.0
libtpu: 0.0.40
codegen_flags: <defaults>
</compile_context>

<pallas_src>
import jax
import jax.numpy as jnp
from jax.experimental import pallas as pl
from jax.experimental.pallas import tpu as pltpu

# Logical sizes from the PyTorch module.
IN_DIM = 35 * 5          # 175
H1_DIM = 16
H2_DIM = 32

# Padded, tile-aligned sizes (lane = 128).
H_PAD = 128              # 16 / 32 -> 128 (lane-dense hidden activations)
OUT_PAD = 128            # 4 -> 128 (lane-dense output => unmasked vst)

# Row offsets inside the packed (256, 128) w2/w3 slab (128-aligned slices).
_W2_OFF = 0
_W3_OFF = H_PAD
_W23_ROWS = 2 * H_PAD    # 256


def dqn_kernel(x_ref, w1_ref, w23_ref, b_ref, out_ref):
    """One batch tile of the fused 3-layer MLP.

    x_ref  : (BT, 175)  f32   raw input states (no host-side pad/cast)
    w1_ref : (175, 128) bf16  layer-1 weight (cols >= 16 are zero)
    w23_ref: (256, 128) bf16  [w2 ; w3] packed row-wise
    b_ref  : (8, 128)   f32   rows 0/1/2 = b1/b2/b3
    out_ref: (BT, 128)  bf16  lane-dense padded Q-values
    """
    x = x_ref[...].astype(jnp.bfloat16)        # VPU cast; K stays 175
    b = b_ref[...]
    w1 = w1_ref[...]
    w2 = w23_ref[_W2_OFF:_W2_OFF + H_PAD, :]   # static, 128-aligned slices
    w3 = w23_ref[_W3_OFF:_W3_OFF + H_PAD, :]

    # Layer 1: bf16 MXU matmul (K=175), f32 accumulate, f32 epilogue.
    h1 = jnp.dot(x, w1, preferred_element_type=jnp.float32) + b[0:1, :]
    h1 = jnp.maximum(h1, 0.0)
    # Layer 2.
    h2 = jnp.dot(h1.astype(jnp.bfloat16), w2,
                 preferred_element_type=jnp.float32) + b[1:2, :]
    h2 = jnp.maximum(h2, 0.0)
    # Layer 3 (no activation).
    out = jnp.dot(h2.astype(jnp.bfloat16), w3,
                  preferred_element_type=jnp.float32) + b[2:3, :]
    out_ref[...] = out.astype(out_ref.dtype)


def _round_up(x, m):
    return (x + m - 1) // m * m


def _choose_batch_tile(B, batch_tile):
    # Multiple of 16 (bf16 sublane packing); at most one tile for small B.
    bt = min(batch_tile, _round_up(max(B, 1), 16))
    # v7x megacore: make sure the "parallel" grid axis has >= 2 steps once each
    # half-tile is still >= 256 rows (still near the HBM roofline on v5e/v6e).
    half = _round_up((B + 1) // 2, 16)
    if half >= 256:
        bt = min(bt, half)
    return bt


def dqn_forward(x, params, *, batch_tile=1024):
    """x: (B, 175) float array. Returns (B, out_dim) f32 Q-values."""
    if x.ndim == 1:
        x = x[None, :]
    w1 = params["w1"]
    w23 = params["w23"]
    b_packed = params["b_packed"]
    out_dim = params["out_dim"]

    B = x.shape[0]
    bt = _choose_batch_tile(B, batch_tile)
    b_pad = _round_up(B, bt)

    xp = x.astype(jnp.float32)                 # no-op if caller already passes f32
    if b_pad != B:
        # Batch-only remainder pad (tiny); no feature-dim pad, no dtype copy.
        xp = jnp.pad(xp, ((0, b_pad - B), (0, 0)))

    out_padded = pl.pallas_call(
        dqn_kernel,
        out_shape=jax.ShapeDtypeStruct((b_pad, OUT_PAD), jnp.bfloat16),
        grid=(b_pad // bt,),
        in_specs=[
            pl.BlockSpec((bt, IN_DIM), lambda i: (i, 0)),        # last dim = full dim
            pl.BlockSpec((IN_DIM, H_PAD), lambda i: (0, 0)),
            pl.BlockSpec((_W23_ROWS, H_PAD), lambda i: (0, 0)),
            pl.BlockSpec((8, OUT_PAD), lambda i: (0, 0)),
        ],
        out_specs=pl.BlockSpec((bt, OUT_PAD), lambda i: (i, 0)),
        compiler_params=pltpu.CompilerParams(
            # Batch tiles are independent: shard across v7x's 2 TensorCores and
            # let the pipeliner overlap DMA of tile i+1 with compute of tile i.
            dimension_semantics=("parallel",)),
    )(xp, w1, w23, b_packed)

    return out_padded[:B, :out_dim].astype(jnp.float32)


def init_dqn_params(key, input_size, output_size):
    """PyTorch-Linear-style init, then pad + pack into tile-aligned buffers."""
    assert input_size == IN_DIM
    dims = [(input_size, H1_DIM), (H1_DIM, H2_DIM), (H2_DIM, output_size)]
    ws, bs = [], []
    for fan_in, fan_out in dims:
        key, kw, kb = jax.random.split(key, 3)
        bound = 1.0 / (fan_in ** 0.5)
        # Stored already transposed: (in_features, out_features).
        ws.append(jax.random.uniform(kw, (fan_in, fan_out), jnp.float32, -bound, bound))
        bs.append(jax.random.uniform(kb, (fan_out,), jnp.float32, -bound, bound))

    # Zero-pad output dims to 128 lanes (padded lanes carry exact zeros through
    # ReLU and are sliced off outside the kernel).  w1 keeps its natural 175
    # rows so layer 1 contracts over K=175 with the unpadded input.
    w1 = jnp.zeros((IN_DIM, H_PAD), jnp.float32).at[:, :H1_DIM].set(ws[0])
    w2p = jnp.zeros((H_PAD, H_PAD), jnp.float32).at[:H1_DIM, :H2_DIM].set(ws[1])
    w3p = jnp.zeros((H_PAD, OUT_PAD), jnp.float32).at[:H2_DIM, :output_size].set(ws[2])

    w1 = w1.astype(jnp.bfloat16)
    w23 = jnp.concatenate([w2p, w3p], axis=0).astype(jnp.bfloat16)

    # Packed f32 bias buffer (rows 0/1/2 = b1/b2/b3), kept f32 for the epilogue.
    b_packed = jnp.zeros((8, OUT_PAD), jnp.float32)
    b_packed = b_packed.at[0, :H1_DIM].set(bs[0])
    b_packed = b_packed.at[1, :H2_DIM].set(bs[1])
    b_packed = b_packed.at[2, :output_size].set(bs[2])

    return {"w1": w1, "w23": w23, "b_packed": b_packed, "out_dim": output_size}


def dqn_reference(x, params):
    """Pure-JAX mirror of the kernel math (bf16 matmul inputs, f32 accum, bf16 out)."""
    out_dim = params["out_dim"]
    w1 = params["w1"]
    w23 = params["w23"]
    b = params["b_packed"]
    xb = x.astype(jnp.bfloat16)
    w2 = w23[_W2_OFF:_W2_OFF + H_PAD]
    w3 = w23[_W3_OFF:_W3_OFF + H_PAD]
    h1 = jnp.maximum(jnp.dot(xb, w1, preferred_element_type=jnp.float32) + b[0:1], 0.0)
    h2 = jnp.maximum(jnp.dot(h1.astype(jnp.bfloat16), w2,
                             preferred_element_type=jnp.float32) + b[1:2], 0.0)
    out = jnp.dot(h2.astype(jnp.bfloat16), w3,
                  preferred_element_type=jnp.float32) + b[2:3]
    return out[:, :out_dim].astype(jnp.bfloat16).astype(jnp.float32)


if __name__ == "__main__":
    input_size = 35 * 5   # 175, as in the reference script
    output_size = 4       # number of actions
    batch = 8

    key = jax.random.PRNGKey(0)
    key, kx = jax.random.split(key)
    x = jax.random.normal(kx, (batch, input_size), jnp.float32)
    params = init_dqn_params(key, input_size, output_size)

    out = dqn_forward(x, params)
    jax.block_until_ready(out)

    ref = dqn_reference(x, params)
    assert out.shape == (batch, output_size)
    assert jnp.allclose(out, ref, atol=2e-2, rtol=2e-2), "mismatch vs JAX reference"

    print("KERNEL_OK")
</pallas_src>

<mosaic_0001>
module attributes {stable_mosaic.version = 11 : i64} {
  func.func @dqn_kernel(%arg0: i32, %arg1: memref<16x175xf32, #tpu.memory_space<vmem>>, %arg2: memref<175x128xbf16, #tpu.memory_space<vmem>>, %arg3: memref<256x128xbf16, #tpu.memory_space<vmem>>, %arg4: memref<8x128xf32, #tpu.memory_space<vmem>>, %arg5: memref<16x128xbf16, #tpu.memory_space<vmem>>) attributes {dimension_semantics = [#tpu.dimension_semantics<parallel>], iteration_bounds = array<i64: 1>, scalar_prefetch = 0 : i64, scratch_operands = 0 : i64, tpu.core_type = #tpu.core_type<tc>, window_params = [{transform_indices = @transform_0, window_bounds = array<i64: 16, 175>}, {pipeline_mode = #tpu.pipeline_mode<synchronous>, transform_indices = @transform_1, window_bounds = array<i64: 175, 128>}, {pipeline_mode = #tpu.pipeline_mode<synchronous>, transform_indices = @transform_2, window_bounds = array<i64: 256, 128>}, {pipeline_mode = #tpu.pipeline_mode<synchronous>, transform_indices = @transform_3, window_bounds = array<i64: 8, 128>}, {transform_indices = @transform_4, window_bounds = array<i64: 16, 128>}]} {
    %c0 = arith.constant 0 : index
    %c0_0 = arith.constant 0 : index
    %0 = vector.load %arg1[%c0, %c0_0] : memref<16x175xf32, #tpu.memory_space<vmem>>, vector<16x175xf32>
    %1 = arith.truncf %0 : vector<16x175xf32> to vector<16x175xbf16>
    %c0_1 = arith.constant 0 : index
    %c0_2 = arith.constant 0 : index
    %2 = vector.load %arg4[%c0_1, %c0_2] : memref<8x128xf32, #tpu.memory_space<vmem>>, vector<8x128xf32>
    %c0_3 = arith.constant 0 : index
    %c0_4 = arith.constant 0 : index
    %3 = vector.load %arg2[%c0_3, %c0_4] : memref<175x128xbf16, #tpu.memory_space<vmem>>, vector<175x128xbf16>
    %c0_5 = arith.constant 0 : index
    %c0_6 = arith.constant 0 : index
    %4 = vector.load %arg3[%c0_5, %c0_6] : memref<256x128xbf16, #tpu.memory_space<vmem>>, vector<128x128xbf16>
    %c128 = arith.constant 128 : index
    %c0_7 = arith.constant 0 : index
    %5 = vector.load %arg3[%c128, %c0_7] : memref<256x128xbf16, #tpu.memory_space<vmem>>, vector<128x128xbf16>
    %cst = arith.constant dense<0.000000e+00> : vector<16x128xf32>
    %6 = tpu.matmul %1, %3, %cst {dimension_numbers = #tpu.dot_dimension_numbers<[1], [0], [0], [1], [0, 0, 1, 1], [], []>} : vector<16x175xbf16>, vector<175x128xbf16>, vector<16x128xf32> -> vector<16x128xf32>
    %7 = vector.extract_strided_slice %2 {offsets = [0, 0], sizes = [1, 128], strides = [1, 1]} : vector<8x128xf32> to vector<1x128xf32>
    %8 = vector.broadcast %7 : vector<1x128xf32> to vector<16x128xf32>
    %9 = arith.addf %6, %8 : vector<16x128xf32>
    %cst_8 = arith.constant 0.000000e+00 : f32
    %10 = vector.broadcast %cst_8 : f32 to vector<16x128xf32>
    %11 = arith.maximumf %9, %10 : vector<16x128xf32>
    %12 = arith.truncf %11 : vector<16x128xf32> to vector<16x128xbf16>
    %cst_9 = arith.constant dense<0.000000e+00> : vector<16x128xf32>
    %13 = tpu.matmul %12, %4, %cst_9 {dimension_numbers = #tpu.dot_dimension_numbers<[1], [0], [0], [1], [0, 0, 1, 1], [], []>} : vector<16x128xbf16>, vector<128x128xbf16>, vector<16x128xf32> -> vector<16x128xf32>
    %14 = vector.extract_strided_slice %2 {offsets = [1, 0], sizes = [1, 128], strides = [1, 1]} : vector<8x128xf32> to vector<1x128xf32>
    %15 = vector.broadcast %14 : vector<1x128xf32> to vector<16x128xf32>
    %16 = arith.addf %13, %15 : vector<16x128xf32>
    %cst_10 = arith.constant 0.000000e+00 : f32
    %17 = vector.broadcast %cst_10 : f32 to vector<16x128xf32>
    %18 = arith.maximumf %16, %17 : vector<16x128xf32>
    %19 = arith.truncf %18 : vector<16x128xf32> to vector<16x128xbf16>
    %cst_11 = arith.constant dense<0.000000e+00> : vector<16x128xf32>
    %20 = tpu.matmul %19, %5, %cst_11 {dimension_numbers = #tpu.dot_dimension_numbers<[1], [0], [0], [1], [0, 0, 1, 1], [], []>} : vector<16x128xbf16>, vector<128x128xbf16>, vector<16x128xf32> -> vector<16x128xf32>
    %21 = vector.extract_strided_slice %2 {offsets = [2, 0], sizes = [1, 128], strides = [1, 1]} : vector<8x128xf32> to vector<1x128xf32>
    %22 = vector.broadcast %21 : vector<1x128xf32> to vector<16x128xf32>
    %23 = arith.addf %20, %22 : vector<16x128xf32>
    %24 = arith.truncf %23 : vector<16x128xf32> to vector<16x128xbf16>
    %c0_12 = arith.constant 0 : index
    %c0_13 = arith.constant 0 : index
    %25 = vector.load %arg5[%c0_12, %c0_13] : memref<16x128xbf16, #tpu.memory_space<vmem>>, vector<16x128xbf16>
    tpu.vector_store %arg5[%c0_12, %c0_13], %24 {strides = array<i32>} : memref<16x128xbf16, #tpu.memory_space<vmem>>, vector<16x128xbf16>,
    return
  }
  func.func @transform_0(%arg0: i32) -> (i32, i32) {
    %c0_i32 = arith.constant 0 : i32
    %c0_i32_0 = arith.constant 0 : i32
    return %arg0, %c0_i32 : i32, i32
  }
  func.func @transform_1(%arg0: i32) -> (i32, i32) {
    %c0_i32 = arith.constant 0 : i32
    %c0_i32_0 = arith.constant 0 : i32
    %c0_i32_1 = arith.constant 0 : i32
    return %c0_i32, %c0_i32_0 : i32, i32
  }
  func.func @transform_2(%arg0: i32) -> (i32, i32) {
    %c0_i32 = arith.constant 0 : i32
    %c0_i32_0 = arith.constant 0 : i32
    %c0_i32_1 = arith.constant 0 : i32
    return %c0_i32, %c0_i32_0 : i32, i32
  }
  func.func @transform_3(%arg0: i32) -> (i32, i32) {
    %c0_i32 = arith.constant 0 : i32
    %c0_i32_0 = arith.constant 0 : i32
    %c0_i32_1 = arith.constant 0 : i32
    return %c0_i32, %c0_i32_0 : i32, i32
  }
  func.func @transform_4(%arg0: i32) -> (i32, i32) {
    %c0_i32 = arith.constant 0 : i32
    %c0_i32_0 = arith.constant 0 : i32
    return %arg0, %c0_i32 : i32, i32
  }
}

</mosaic_0001>

<llo_original>
// kernel: tpu_custom_call.1
$region0: #{tpu_custom_call.1}
  #allocation0 [shape = 'u32[]', space=smem, size = 0x4, offset = 0x4, fixed_abs, tag = 'smem constant byte address 0x4 - core index']
  #allocation1 [shape = 'u32[144,128]{1,0:T(1,128)}', space=vmem, size = 0x12000, scoped, tag = 'internal scratch']
  %s0 = inlined_call_operand.hbm [shape: f32[16,175], index: 0, kind: input, shape index: {}]
  %s1 = inlined_call_operand.hbm [shape: bf16[175,128], index: 1, kind: input, shape index: {}]
  %s2 = inlined_call_operand.hbm [shape: bf16[256,128], index: 2, kind: input, shape index: {}]
  %s3 = inlined_call_operand.hbm [shape: f32[8,128], index: 3, kind: input, shape index: {}]
  %s4 = inlined_call_operand.hbm [shape: bf16[16,128], index: 4, kind: output, shape index: {}]
  %s5 = sld [smem:[#allocation0]]
  $region42: #{tpu_custom_call.1} parent=0
    _
  %s7 = ssub.s32 1, %s5
  %s8 = scalar_select 0, %s7, %s5
  $region1: #{tpu_custom_call.1} parent=0
    #allocation2 [shape = 'u8[16384]{0}', space=vmem, size = 0x4000, scoped, tag = 'input window, operand 0, single buffered']
    #allocation3 [shape = 's32[1]{0}', space=sflag, size = 0x4, scoped, tag = 'scoped memory for tpu_custom_call.1']
    #allocation4 [shape = 's32[1]{0}', space=sflag, size = 0x4, scoped, tag = 'scoped memory for tpu_custom_call.1']
    #allocation5 [shape = 'u8[45056]{0}', space=vmem, size = 0xb000, scoped, tag = 'input window, operand 1, single buffered']
    #allocation6 [shape = 's32[1]{0}', space=sflag, size = 0x4, scoped, tag = 'scoped memory for tpu_custom_call.1']
    #allocation7 [shape = 'u8[65536]{0}', space=vmem, size = 0x10000, scoped, tag = 'input window, operand 2, single buffered']
    #allocation8 [shape = 'u8[4096]{0}', space=vmem, size = 0x1000, scoped, tag = 'input window, operand 3, single buffered']
    #allocation9 [shape = 's32[1]{0}', space=sflag, size = 0x4, scoped, tag = 'scoped memory for tpu_custom_call.1']
    #allocation10 [shape = 'u8[4096]{0}', space=vmem, size = 0x1000, scoped, tag = 'output window, operand 0, single buffered']
    %9 = vsyncpa [#allocation3], 0
    %10 = vsyncpa [#allocation6], 0
    %11 = vsyncpa [#allocation9], 0
    %12 = vsyncpa [#allocation4], 0
    // Predicated region
    $region2: #{tpu_custom_call.1} parent=1 // pred_check
      _
    $region3: #{tpu_custom_call.1} parent=1 // pred_check_branch
      %14 = sbr.rel (0) target = $region5
    $region4: #{tpu_custom_call.1} parent=1 // pred_region
      %s16 = ssub.s32 512, 512
      %17 = vsyncadd [#allocation3], %s16
      %s18 = sshll.u32 [#allocation2], 4
      %s19 = int_to_ptr.vmem [resolvable:$true] %s18
      %24 = dma.hbm_to_vmem [thread:$0]  %s0, 512, %s19, [#allocation3], 256, 256, 16
    $region5: #{tpu_custom_call.1} parent=1 // pred_fallthru
      _
    // Predicated region
    $region6: #{tpu_custom_call.1} parent=1 // pred_check
      _
    $region7: #{tpu_custom_call.1} parent=1 // pred_check_branch
      %26 = sbr.rel (0) target = $region9
    $region8: #{tpu_custom_call.1} parent=1 // pred_region
      %s28 = ssub.s32 1408, 1408
      %29 = vsyncadd [#allocation6], %s28
      %s30 = sshll.u32 [#allocation5], 4
      %s31 = int_to_ptr.vmem [resolvable:$true] %s30
      %36 = dma.hbm_to_vmem [thread:$0]  %s1, 1408, %s31, [#allocation6], 64, 64, 4
    $region9: #{tpu_custom_call.1} parent=1 // pred_fallthru
      _
    // Predicated region
    $region10: #{tpu_custom_call.1} parent=1 // pred_check
      _
    $region11: #{tpu_custom_call.1} parent=1 // pred_check_branch
      %38 = sbr.rel (0) target = $region13
    $region12: #{tpu_custom_call.1} parent=1 // pred_region
      %s40 = ssub.s32 2048, 2048
      %41 = vsyncadd [#allocation6], %s40
      %s42 = sshll.u32 [#allocation7], 4
      %s43 = int_to_ptr.vmem [resolvable:$true] %s42
      %48 = dma.hbm_to_vmem [thread:$0]  %s2, 2048, %s43, [#allocation6], 64, 64, 4
    $region13: #{tpu_custom_call.1} parent=1 // pred_fallthru
      _
    // Predicated region
    $region14: #{tpu_custom_call.1} parent=1 // pred_check
      _
    $region15: #{tpu_custom_call.1} parent=1 // pred_check_branch
      %50 = sbr.rel (0) target = $region17
    $region16: #{tpu_custom_call.1} parent=1 // pred_region
      %s52 = ssub.s32 128, 128
      %53 = vsyncadd [#allocation9], %s52
      %s55 = sshll.u32 [#allocation8], 4
      %s56 = int_to_ptr.vmem [resolvable:$true] %s55
      %58 = dma.hbm_to_vmem [thread:$0]  %s3, 128, %s56, [#allocation9]
    $region17: #{tpu_custom_call.1} parent=1 // pred_fallthru
      _
    // Predicated region
    $region18: #{tpu_custom_call.1} parent=1 // pred_check
      _
    $region19: #{tpu_custom_call.1} parent=1 // pred_check_branch
      %60 = sbr.rel (0) target = $region21
    $region20: #{tpu_custom_call.1} parent=1 // pred_region
      %61 = dma.done [#allocation3], 512
    $region21: #{tpu_custom_call.1} parent=1 // pred_fallthru
      _
    // Predicated region
    $region22: #{tpu_custom_call.1} parent=1 // pred_check
      _
    $region23: #{tpu_custom_call.1} parent=1 // pred_check_branch
      %63 = sbr.rel (0) target = $region25
    $region24: #{tpu_custom_call.1} parent=1 // pred_region
      %64 = dma.done [#allocation6], 1408
    $region25: #{tpu_custom_call.1} parent=1 // pred_fallthru
      _
    // Predicated region
    $region26: #{tpu_custom_call.1} parent=1 // pred_check
      _
    $region27: #{tpu_custom_call.1} parent=1 // pred_check_branch
      %66 = sbr.rel (0) target = $region29
    $region28: #{tpu_custom_call.1} parent=1 // pred_region
      %67 = dma.done [#allocation6], 2048
    $region29: #{tpu_custom_call.1} parent=1 // pred_fallthru
      _
    // Predicated region
    $region30: #{tpu_custom_call.1} parent=1 // pred_check
      _
    $region31: #{tpu_custom_call.1} parent=1 // pred_check_branch
      %69 = sbr.rel (0) target = $region33
    $region32: #{tpu_custom_call.1} parent=1 // pred_region
      %70 = dma.done [#allocation9], 128
    $region33: #{tpu_custom_call.1} parent=1 // pred_fallthru
      _
    %v72 = vld [vmem:[#allocation2] sm:$0xff]
    %v73 = vld [vmem:[#allocation2 + $0x8] sm:$0xff]
    %v74 = vld [vmem:[#allocation2 + $0x10] sm:$0xff]
    %v75 = vld [vmem:[#allocation2 + $0x18] sm:$0xff]
    %v76 = vpack.c.bf16 %v74, %v72
    %v77 = vpack.c.bf16 %v75, %v73
    %v78 = vld [vmem:[#allocation8] sm:$0xff]
    %v79 = vld [vmem:[#allocation5] sm:$0xf]
    %v80 = vld [vmem:[#allocation5 + $0x4] sm:$0xf]
    %v81 = vld [vmem:[#allocation5 + $0x8] sm:$0xf]
    %v82 = vld [vmem:[#allocation5 + $0xc] sm:$0xf]
    %v83 = vld [vmem:[#allocation5 + $0x10] sm:$0xf]
    %v84 = vld [vmem:[#allocation5 + $0x14] sm:$0xf]
    %v85 = vld [vmem:[#allocation5 + $0x18] sm:$0xf]
    %v86 = vld [vmem:[#allocation5 + $0x1c] sm:$0xf]
    %v87 = vld [vmem:[#allocation5 + $0x20] sm:$0xf]
    %v88 = vld [vmem:[#allocation5 + $0x24] sm:$0xf]
    %v89 = vld [vmem:[#allocation5 + $0x28] sm:$0xf]
    %v90 = vld [vmem:[#allocation5 + $0x2c] sm:$0xf]
    %v91 = vld [vmem:[#allocation5 + $0x30] sm:$0xf]
    %v92 = vld [vmem:[#allocation5 + $0x34] sm:$0xf]
    %v93 = vld [vmem:[#allocation5 + $0x38] sm:$0xf]
    %v94 = vld [vmem:[#allocation5 + $0x3c] sm:$0xf]
    %v95 = vld [vmem:[#allocation5 + $0x40] sm:$0xf]
    %v96 = vld [vmem:[#allocation5 + $0x44] sm:$0xf]
    %v97 = vld [vmem:[#allocation5 + $0x48] sm:$0xf]
    %v98 = vld [vmem:[#allocation5 + $0x4c] sm:$0xf]
    %v99 = vld [vmem:[#allocation5 + $0x50] sm:$0xf]
    %v100 = vld [vmem:[#allocation5 + $0x54] sm:$0xf]
    %v101 = vld [vmem:[#allocation7] sm:$0xf]
    %v102 = vld [vmem:[#allocation7 + $0x4] sm:$0xf]
    %v103 = vld [vmem:[#allocation7 + $0x8] sm:$0xf]
    %v104 = vld [vmem:[#allocation7 + $0xc] sm:$0xf]
    %v105 = vld [vmem:[#allocation7 + $0x10] sm:$0xf]
    %v106 = vld [vmem:[#allocation7 + $0x14] sm:$0xf]
    %v107 = vld [vmem:[#allocation7 + $0x18] sm:$0xf]
    %v108 = vld [vmem:[#allocation7 + $0x1c] sm:$0xf]
    %v109 = vld [vmem:[#allocation7 + $0x20] sm:$0xf]
    %v110 = vld [vmem:[#allocation7 + $0x24] sm:$0xf]
    %v111 = vld [vmem:[#allocation7 + $0x28] sm:$0xf]
    %v112 = vld [vmem:[#allocation7 + $0x2c] sm:$0xf]
    %v113 = vld [vmem:[#allocation7 + $0x30] sm:$0xf]
    %v114 = vld [vmem:[#allocation7 + $0x34] sm:$0xf]
    %v115 = vld [vmem:[#allocation7 + $0x38] sm:$0xf]
    %v116 = vld [vmem:[#allocation7 + $0x3c] sm:$0xf]
    %v117 = vld [vmem:[#allocation7 + $0x40] sm:$0xf]
    %v118 = vld [vmem:[#allocation7 + $0x44] sm:$0xf]
    %v119 = vld [vmem:[#allocation7 + $0x48] sm:$0xf]
    %v120 = vld [vmem:[#allocation7 + $0x4c] sm:$0xf]
    %v121 = vld [vmem:[#allocation7 + $0x50] sm:$0xf]
    %v122 = vld [vmem:[#allocation7 + $0x54] sm:$0xf]
    %v123 = vld [vmem:[#allocation7 + $0x58] sm:$0xf]
    %v124 = vld [vmem:[#allocation7 + $0x5c] sm:$0xf]
    %v125 = vld [vmem:[#allocation7 + $0x60] sm:$0xf]
    %v126 = vld [vmem:[#allocation7 + $0x64] sm:$0xf]
    %v127 = vld [vmem:[#allocation7 + $0x68] sm:$0xf]
    %v128 = vld [vmem:[#allocation7 + $0x6c] sm:$0xf]
    %v129 = vld [vmem:[#allocation7 + $0x70] sm:$0xf]
    %v130 = vld [vmem:[#allocation7 + $0x74] sm:$0xf]
    %v131 = vld [vmem:[#allocation7 + $0x78] sm:$0xf]
    %v132 = vld [vmem:[#allocation7 + $0x7c] sm:$0xf]
    %v133 = vlaneseq
    %v134 = vshrl.u32 %v133, 7
    %v135 = vsub.s32 0, %v134
    %v136 = vrot.slane %v78, %v135
    %v159 = vunpack.c.l.b16 %v79
    %v160 = vunpack.c.l.b16 %v80
    %v161 = vunpack.c.l.b16 %v81
    %v162 = vunpack.c.l.b16 %v82
    %v163 = vunpack.c.l.b16 %v83
    %v164 = vunpack.c.l.b16 %v84
    %v165 = vunpack.c.l.b16 %v85
    %v166 = vunpack.c.l.b16 %v86
    %v167 = vunpack.c.l.b16 %v87
    %v168 = vunpack.c.l.b16 %v88
    %v169 = vunpack.c.l.b16 %v89
    %v170 = vunpack.c.l.b16 %v90
    %v171 = vunpack.c.l.b16 %v91
    %v172 = vunpack.c.l.b16 %v92
    %v173 = vunpack.c.l.b16 %v93
    %v174 = vunpack.c.l.b16 %v94
    %v175 = vunpack.c.l.b16 %v95
    %v176 = vunpack.c.l.b16 %v96
    %v177 = vunpack.c.l.b16 %v97
    %v178 = vunpack.c.l.b16 %v98
    %v179 = vunpack.c.l.b16 %v99
    %v180 = vunpack.c.l.b16 %v100
    %v181 = vpack.c.b16 %v160, %v159
    %v182 = vpack.c.b16 %v162, %v161
    %v183 = vpack.c.b16 %v164, %v163
    %v184 = vpack.c.b16 %v166, %v165
    %v185 = vpack.c.b16 %v168, %v167
    %v186 = vpack.c.b16 %v170, %v169
    %v187 = vpack.c.b16 %v172, %v171
    %v188 = vpack.c.b16 %v174, %v173
    %v189 = vpack.c.b16 %v176, %v175
    %v190 = vpack.c.b16 %v178, %v177
    %v191 = vpack.c.b16 %v180, %v179
    %vm202 = vcmask 384000
    %v204 = vsel %vm202, %v77, 0
    %vm206 = vcmask 1046528
    %vm207 = vcmask 1047552
    %v208 = vsel %vm206, 4294967295, 65535
    %v209 = vsel %vm207, %v208, 0
    %v211 = vand.u32 %v191, %v209
    %213 = vmatprep.subr.bf16.mxu0 0
    %214 = vmatpush1.bf16.msra.mxu0 %v188
    %215 = vmatprep.subr.bf16.mxu0 0
    %216 = vmatpush1.bf16.msra.mxu0 %v187
    %217 = vmatprep.subr.bf16.mxu0 0
    %218 = vmatpush1.bf16.msra.mxu0 %v186
    %219 = vmatprep.subr.bf16.mxu0 0
    %220 = vmatpush1.bf16.msra.mxu0 %v185
    %221 = vmatprep.subr.bf16.mxu0 0
    %222 = vmatpush1.bf16.msra.mxu0 %v184
    %223 = vmatprep.subr.bf16.mxu0 0
    %224 = vmatpush1.bf16.msra.mxu0 %v183
    %225 = vmatprep.subr.bf16.mxu0 0
    %226 = vmatpush1.bf16.msra.mxu0 %v182
    %227 = vmatprep.subr.bf16.mxu0 0
    %228 = vmatpush1.bf16.msra.mxu0 %v181
    %229 = vmatprep.subr.bf16.mxu0 0
    %230 = vmatpush2.bf16.msra.mxu0 0
    %231 = vmatprep.subr.bf16.mxu0 0
    %232 = vmatpush2.bf16.msra.mxu0 0
    %233 = vmatprep.subr.bf16.mxu0 0
    %234 = vmatpush2.bf16.msra.mxu0 0
    %235 = vmatprep.subr.bf16.mxu0 0
    %236 = vmatpush2.bf16.msra.mxu0 0
    %237 = vmatprep.subr.bf16.mxu0 0
    %238 = vmatpush2.bf16.msra.mxu0 0
    %239 = vmatprep.subr.bf16.mxu0 0
    %240 = vmatpush2.bf16.msra.mxu0 %v211
    %241 = vmatprep.subr.bf16.mxu0 0
    %242 = vmatpush2.bf16.msra.mxu0 %v190
    %243 = vmatprep.subr.bf16.mxu0 0
    %244 = vmatpush2.bf16.msra.mxu0 %v189
    %245 = vmatprep.mubr.bf16.mxu0 %v204
    %246 = vmatmul.mubr.bf16.gmra.mxu0 %v76
    %v247 = vpop.f32.mrf.mxu0
    %v248 = vadd.f32 %v136, %v247
    %v249 = vpop.f32.mrf.mxu0
    %v250 = vpop.f32.mrf.mxu0
    %v251 = vadd.f32 %v136, %v250
    %v252 = vpop.f32.mrf.mxu0
    %253 = vdwg.mxu0
    %v254 = vmax.f32 %v248, 0.0
    %v255 = vmax.f32 %v251, 0.0
    %v256 = vpack.c.bf16 %v255, %v254
    %v257 = vlaneseq
    %v258 = vshrl.u32 %v257, 7
    %v259 = vsub.s32 1, %v258
    %v260 = vrot.slane %v78, %v259
    %v277 = vunpack.c.l.b16 %v101
    %v278 = vunpack.c.l.b16 %v102
    %v279 = vunpack.c.l.b16 %v103
    %v280 = vunpack.c.l.b16 %v104
    %v281 = vunpack.c.l.b16 %v105
    %v282 = vunpack.c.l.b16 %v106
    %v283 = vunpack.c.l.b16 %v107
    %v284 = vunpack.c.l.b16 %v108
    %v285 = vunpack.c.l.b16 %v109
    %v286 = vunpack.c.l.b16 %v110
    %v287 = vunpack.c.l.b16 %v111
    %v288 = vunpack.c.l.b16 %v112
    %v289 = vunpack.c.l.b16 %v113
    %v290 = vunpack.c.l.b16 %v114
    %v291 = vunpack.c.l.b16 %v115
    %v292 = vunpack.c.l.b16 %v116
    %v293 = vpack.c.b16 %v278, %v277
    %v294 = vpack.c.b16 %v280, %v279
    %v295 = vpack.c.b16 %v282, %v281
    %v296 = vpack.c.b16 %v284, %v283
    %v297 = vpack.c.b16 %v286, %v285
    %v298 = vpack.c.b16 %v288, %v287
    %v299 = vpack.c.b16 %v290, %v289
    %v300 = vpack.c.b16 %v292, %v291
    %309 = vmatprep.subr.bf16.mxu0 0
    %310 = vmatpush1.bf16.msra.mxu0 %v300
    %311 = vmatprep.subr.bf16.mxu0 0
    %312 = vmatpush1.bf16.msra.mxu0 %v299
    %313 = vmatprep.subr.bf16.mxu0 0
    %314 = vmatpush1.bf16.msra.mxu0 %v298
    %315 = vmatprep.subr.bf16.mxu0 0
    %316 = vmatpush1.bf16.msra.mxu0 %v297
    %317 = vmatprep.subr.bf16.mxu0 0
    %318 = vmatpush1.bf16.msra.mxu0 %v296
    %319 = vmatprep.subr.bf16.mxu0 0
    %320 = vmatpush1.bf16.msra.mxu0 %v295
    %321 = vmatprep.subr.bf16.mxu0 0
    %322 = vmatpush1.bf16.msra.mxu0 %v294
    %323 = vmatprep.subr.bf16.mxu0 0
    %324 = vmatpush1.bf16.msra.mxu0 %v293
    %325 = vmatprep.subr.bf16.mxu0 0
    %326 = vmatpush2.bf16.msra.mxu0 0
    %327 = vmatprep.subr.bf16.mxu0 0
    %328 = vmatpush2.bf16.msra.mxu0 0
    %329 = vmatprep.subr.bf16.mxu0 0
    %330 = vmatpush2.bf16.msra.mxu0 0
    %331 = vmatprep.subr.bf16.mxu0 0
    %332 = vmatpush2.bf16.msra.mxu0 0
    %333 = vmatprep.subr.bf16.mxu0 0
    %334 = vmatpush2.bf16.msra.mxu0 0
    %335 = vmatprep.subr.bf16.mxu0 0
    %336 = vmatpush2.bf16.msra.mxu0 0
    %337 = vmatprep.subr.bf16.mxu0 0
    %338 = vmatpush2.bf16.msra.mxu0 0
    %339 = vmatprep.subr.bf16.mxu0 0
    %340 = vmatpush2.bf16.msra.mxu0 0
    %341 = vmatprep.mubr.bf16.mxu0 0
    %342 = vmatmul.mubr.bf16.gmra.mxu0 %v256
    %v343 = vpop.f32.mrf.mxu0
    %v344 = vadd.f32 %v260, %v343
    %v345 = vpop.f32.mrf.mxu0
    %v346 = vpop.f32.mrf.mxu0
    %v347 = vadd.f32 %v260, %v346
    %v348 = vpop.f32.mrf.mxu0
    %349 = vdwg.mxu0
    %v350 = vmax.f32 %v344, 0.0
    %v351 = vmax.f32 %v347, 0.0
    %v352 = vpack.c.bf16 %v351, %v350
    %v353 = vlaneseq
    %v354 = vshrl.u32 %v353, 7
    %v355 = vsub.s32 2, %v354
    %v356 = vrot.slane %v78, %v355
    %v373 = vunpack.c.l.b16 %v117
    %v374 = vunpack.c.l.b16 %v118
    %v375 = vunpack.c.l.b16 %v119
    %v376 = vunpack.c.l.b16 %v120
    %v377 = vunpack.c.l.b16 %v121
    %v378 = vunpack.c.l.b16 %v122
    %v379 = vunpack.c.l.b16 %v123
    %v380 = vunpack.c.l.b16 %v124
    %v381 = vunpack.c.l.b16 %v125
    %v382 = vunpack.c.l.b16 %v126
    %v383 = vunpack.c.l.b16 %v127
    %v384 = vunpack.c.l.b16 %v128
    %v385 = vunpack.c.l.b16 %v129
    %v386 = vunpack.c.l.b16 %v130
    %v387 = vunpack.c.l.b16 %v131
    %v388 = vunpack.c.l.b16 %v132
    %v389 = vpack.c.b16 %v374, %v373
    %v390 = vpack.c.b16 %v376, %v375
    %v391 = vpack.c.b16 %v378, %v377
    %v392 = vpack.c.b16 %v380, %v379
    %v393 = vpack.c.b16 %v382, %v381
    %v394 = vpack.c.b16 %v384, %v383
    %v395 = vpack.c.b16 %v386, %v385
    %v396 = vpack.c.b16 %v388, %v387
    %405 = vmatprep.subr.bf16.mxu0 0
    %406 = vmatpush1.bf16.msra.mxu0 %v396
    %407 = vmatprep.subr.bf16.mxu0 0
    %408 = vmatpush1.bf16.msra.mxu0 %v395
    %409 = vmatprep.subr.bf16.mxu0 0
    %410 = vmatpush1.bf16.msra.mxu0 %v394
    %411 = vmatprep.subr.bf16.mxu0 0
    %412 = vmatpush1.bf16.msra.mxu0 %v393
    %413 = vmatprep.subr.bf16.mxu0 0
    %414 = vmatpush1.bf16.msra.mxu0 %v392
    %415 = vmatprep.subr.bf16.mxu0 0
    %416 = vmatpush1.bf16.msra.mxu0 %v391
    %417 = vmatprep.subr.bf16.mxu0 0
    %418 = vmatpush1.bf16.msra.mxu0 %v390
    %419 = vmatprep.subr.bf16.mxu0 0
    %420 = vmatpush1.bf16.msra.mxu0 %v389
    %421 = vmatprep.subr.bf16.mxu0 0
    %422 = vmatpush2.bf16.msra.mxu0 0
    %423 = vmatprep.subr.bf16.mxu0 0
    %424 = vmatpush2.bf16.msra.mxu0 0
    %425 = vmatprep.subr.bf16.mxu0 0
    %426 = vmatpush2.bf16.msra.mxu0 0
    %427 = vmatprep.subr.bf16.mxu0 0
    %428 = vmatpush2.bf16.msra.mxu0 0
    %429 = vmatprep.subr.bf16.mxu0 0
    %430 = vmatpush2.bf16.msra.mxu0 0
    %431 = vmatprep.subr.bf16.mxu0 0
    %432 = vmatpush2.bf16.msra.mxu0 0
    %433 = vmatprep.subr.bf16.mxu0 0
    %434 = vmatpush2.bf16.msra.mxu0 0
    %435 = vmatprep.subr.bf16.mxu0 0
    %436 = vmatpush2.bf16.msra.mxu0 0
    %437 = vmatprep.mubr.bf16.mxu0 0
    %438 = vmatmul.mubr.bf16.gmra.mxu0 %v352
    %v439 = vpop.f32.mrf.mxu0
    %v440 = vadd.f32 %v356, %v439
    %v441 = vpop.f32.mrf.mxu0
    %v442 = vpop.f32.mrf.mxu0
    %v443 = vadd.f32 %v356, %v442
    %v444 = vpop.f32.mrf.mxu0
    %445 = vdwg.mxu0
    %v446 = vpack.c.bf16 %v443, %v440
    %v448 = vunpack.c.l.b16 %v446
    %v449 = vunpack.c.h.b16 %v446
    %v450 = vpack.c.b16 %v448, %v448
    %v451 = vpack.c.b16 %v449, %v449
    %454 = vst [vmem:[#allocation10] sm:$0xf] %v450
    %455 = vst [vmem:[#allocation10 + $0x4] sm:$0xf] %v451
    // Predicated region
    $region34: #{tpu_custom_call.1} parent=1 // pred_check
      _
    $region35: #{tpu_custom_call.1} parent=1 // pred_check_branch
      %457 = sbr.rel (0) target = $region37
    $region36: #{tpu_custom_call.1} parent=1 // pred_region
      %s459 = ssub.s32 128, 128
      %460 = vsyncadd [#allocation4], %s459
      %s461 = sshll.u32 [#allocation10], 4
      %s462 = int_to_ptr.vmem [resolvable:$true] %s461
      %467 = dma.vmem_to_hbm [thread:$0]  %s462, 128, %s4, [#allocation4], 64, 64, 4
    $region37: #{tpu_custom_call.1} parent=1 // pred_fallthru
      _
    // Predicated region
    $region38: #{tpu_custom_call.1} parent=1 // pred_check
      _
    $region39: #{tpu_custom_call.1} parent=1 // pred_check_branch
      %469 = sbr.rel (0) target = $region41
    $region40: #{tpu_custom_call.1} parent=1 // pred_region
      %470 = dma.done [#allocation4], 128
    $region41: #{tpu_custom_call.1} parent=1 // pred_fallthru
      _
    %471 = vsyncpa [#allocation3], 1
    %472 = vsyncpa [#allocation6], 1
    %473 = vsyncpa [#allocation9], 1
    %474 = vsyncpa [#allocation4], 1

</llo_original>
